<compile_context>
chip_gen: v7x
topology: tpu7x:2x2x1
jax: 0.10.0
libtpu: 0.0.40
codegen_flags: <defaults>
</compile_context>

<pallas_src>
import math
import numpy as np
import jax
import jax.numpy as jnp
from jax.experimental import pallas as pl
from jax.experimental.pallas import tpu as pltpu


# ----------------------------------------------------------------------------
# Config (small, consistent with the module's __init__ signature)
# ----------------------------------------------------------------------------
ASDF_CHANNEL = 4           # asdf_channel
SH_2D_DEGREE = 2           # sh_2d_degree
SH_3D_DEGREE = 2           # sh_3d_degree
HIDDEN_DIM = 32            # hidden_dim
SAMPLE_DIRECTION_NUM = 16  # sample_direction_num
DIRECTION_UPSCALE = 2      # TODO(synk): direction-grid upscaling of ASDFModel is not reconstructed.
RAD_DENSITY = 10           # self.rad_density = 10 in the reference module
N_POINTS = 64

N_SH2D = 2 * SH_2D_DEGREE + 1
N_SH3D = (SH_3D_DEGREE + 1) ** 2
K_SH = N_SH2D + N_SH3D
PARAM_DIM = 3 + K_SH                       # [center(3), sh2d, sh3d] per anchor channel (=17)

C = ASDF_CHANNEL
D = SAMPLE_DIRECTION_NUM
R = RAD_DENSITY
NTOT = C * R * D                           # 640 -> multiple of 128 (lane-dense output)

LANE = 128
# slab row offsets (all 8-aligned)
_W1_R, _B1_R = 0, 8
_W2_R, _B2_R = 16, 144
_W3_R, _B3_R = 152, 280
SLAB_ROWS = 288


# ----------------------------------------------------------------------------
# Fused Pallas kernel: PointNet encoder -> SH decode -> ray points
# ----------------------------------------------------------------------------
def _asdf_fused_kernel(pts_ref, slab_ref, decm_ref, aux_ref, out_ref):
    # ---------------- encoder: per-point MLP -> max pool -> head -------------
    pts = pts_ref[...]                                                    # [N, 8] (xyz + zero pad)
    h1 = jnp.dot(pts, slab_ref[_W1_R:_W1_R + 8, :],
                 preferred_element_type=jnp.float32) + slab_ref[_B1_R:_B1_R + 1, :]
    h1 = jnp.maximum(h1, 0.0)                                             # [N, 128]
    h2 = jnp.dot(h1, slab_ref[_W2_R:_W2_R + LANE, :],
                 preferred_element_type=jnp.float32) + slab_ref[_B2_R:_B2_R + 1, :]
    h2 = jnp.maximum(h2, 0.0)                                             # [N, 128]
    g = jnp.max(h2, axis=0, keepdims=True)                                # [1, 128] global max pool
    head = jnp.dot(g, slab_ref[_W3_R:_W3_R + LANE, :],
                   preferred_element_type=jnp.float32) + slab_ref[_B3_R:_B3_R + 1, :]  # [1,128]
    # head[:, :C*PARAM_DIM] are the asdf params (flattened [C, PARAM_DIM]); rest is exactly 0.

    # ---------------- decoder: radius(c,d) = |coeffs . SH(d)|;  --------------
    # ----------------          point = center + t_r * radius * dir -----------
    # rho_flat[n] = | sum_j head[j] * B[j, n] |      (n = c*R*D + r*D + d)
    rho = jnp.abs(jnp.dot(head, decm_ref[:, :NTOT],
                          preferred_element_type=jnp.float32))            # [1, NTOT]
    # ctr_flat[a, n] = head[c(n)*P + a]  via masked 3-row matmul (no column extracts)
    ctr = jnp.dot(head * aux_ref[:, :LANE], decm_ref[:, NTOT:],
                  preferred_element_type=jnp.float32)                     # [3, NTOT]
    # td[a, n] = t[r(n)] * dir[d(n), a]   (precomputed constant)
    out_ref[...] = ctr + rho * aux_ref[:, LANE:]                          # single lane-dense store


# ----------------------------------------------------------------------------
# Parameter construction (deterministic, synthetic) + packing into one slab
# ----------------------------------------------------------------------------
def init_params(key):
    ks = jax.random.split(key, 6)
    s = 0.1
    return {
        "w1": s * jax.random.normal(ks[0], (3, HIDDEN_DIM), jnp.float32),
        "b1": s * jax.random.normal(ks[1], (HIDDEN_DIM,), jnp.float32),
        "w2": s * jax.random.normal(ks[2], (HIDDEN_DIM, HIDDEN_DIM), jnp.float32),
        "b2": s * jax.random.normal(ks[3], (HIDDEN_DIM,), jnp.float32),
        "w3": s * jax.random.normal(ks[4], (HIDDEN_DIM, C * PARAM_DIM), jnp.float32),
        "b3": s * jax.random.normal(ks[5], (C * PARAM_DIM,), jnp.float32),
    }


def pack_params(params):
    """Pack all weights/biases into one zero-padded [288, 128] f32 slab (single DMA)."""
    slab = jnp.zeros((SLAB_ROWS, LANE), jnp.float32)
    slab = slab.at[_W1_R:_W1_R + 3, :HIDDEN_DIM].set(params["w1"])
    slab = slab.at[_B1_R, :HIDDEN_DIM].set(params["b1"])
    slab = slab.at[_W2_R:_W2_R + HIDDEN_DIM, :HIDDEN_DIM].set(params["w2"])
    slab = slab.at[_B2_R, :HIDDEN_DIM].set(params["b2"])
    slab = slab.at[_W3_R:_W3_R + HIDDEN_DIM, :C * PARAM_DIM].set(params["w3"])
    slab = slab.at[_B3_R, :C * PARAM_DIM].set(params["b3"])
    return slab


# ----------------------------------------------------------------------------
# Host-side glue: fibonacci directions, real SH bases, decoder constant tables
# (built ONCE at import time; baked as constants under jit)
# ----------------------------------------------------------------------------
def _fibonacci_sphere(n):
    i = np.arange(n, dtype=np.float64) + 0.5
    golden = math.pi * (3.0 - math.sqrt(5.0))
    z = 1.0 - 2.0 * i / n
    rad = np.sqrt(np.maximum(1.0 - z * z, 0.0))
    ang = golden * i
    return np.stack([rad * np.cos(ang), rad * np.sin(ang), z], axis=1)     # [n, 3]


def _assoc_legendre(l, m, x):
    pmm = np.ones_like(x)
    if m > 0:
        somx2 = np.sqrt(np.maximum(1.0 - x * x, 0.0))
        fact = 1.0
        for _ in range(m):
            pmm = -pmm * fact * somx2
            fact += 2.0
    if l == m:
        return pmm
    pmmp1 = x * (2 * m + 1) * pmm
    if l == m + 1:
        return pmmp1
    pll = pmmp1
    for ll in range(m + 2, l + 1):
        pll = ((2 * ll - 1) * x * pmmp1 - (ll + m - 1) * pmm) / (ll - m)
        pmm, pmmp1 = pmmp1, pll
    return pll


def _sh3d_basis(dirs, degree):
    x, y, z = dirs[:, 0], dirs[:, 1], dirs[:, 2]
    ct = np.clip(z, -1.0, 1.0)
    phi = np.arctan2(y, x)
    cols = []
    for l in range(degree + 1):
        for m in range(-l, l + 1):
            am = abs(m)
            norm = math.sqrt((2 * l + 1) / (4 * math.pi)
                             * math.factorial(l - am) / math.factorial(l + am))
            p = _assoc_legendre(l, am, ct)
            if m > 0:
                cols.append(math.sqrt(2.0) * norm * np.cos(m * phi) * p)
            elif m < 0:
                cols.append(math.sqrt(2.0) * norm * np.sin(am * phi) * p)
            else:
                cols.append(norm * p)
    return np.stack(cols, axis=1)          # [D, (degree+1)^2]


def _sh2d_basis(dirs, degree):
    phi = np.arctan2(dirs[:, 1], dirs[:, 0])
    cols = [np.ones_like(phi)]
    for m in range(1, degree + 1):
        cols.append(np.cos(m * phi))
        cols.append(np.sin(m * phi))
    return np.stack(cols, axis=1)          # [D, 2*degree+1]


_DIRS_NP = _fibonacci_sphere(D)                                            # [D, 3]
_BASIS_NP = np.concatenate([_sh2d_basis(_DIRS_NP, SH_2D_DEGREE),
                            _sh3d_basis(_DIRS_NP, SH_3D_DEGREE)], axis=1)  # [D, K_SH]
# TODO(synk): the radial sampling convention of ASDFModel.forwardASDF is assumed to be t=(1..R)/R.
_T_NP = np.arange(1, R + 1, dtype=np.float64) / R                          # [R]


def _build_decoder_constants():
    n = np.arange(NTOT)
    c_n = n // (R * D)
    r_n = (n // D) % R
    d_n = n % D

    b_big = np.zeros((LANE, NTOT))     # rho selector:  B[c*P+3+k, n] = basis[d(n),k] * [c(n)==c]
    e_big = np.zeros((LANE, NTOT))     # center selector: E[c*P+a, n] = [c(n)==c]
    for c in range(C):
        on_c = (c_n == c).astype(np.float64)
        for k in range(K_SH):
            b_big[c * PARAM_DIM + 3 + k, :] = _BASIS_NP[d_n, k] * on_c
        for a in range(3):
            e_big[c * PARAM_DIM + a, :] = on_c
    dec_m = np.concatenate([b_big, e_big], axis=1)                         # [128, 2*NTOT]

    mask3 = np.zeros((3, LANE))        # mask3[a, c*P+a] = 1  (picks axis-a centers out of head)
    td = np.zeros((3, NTOT))           # td[a, n] = t[r(n)] * dir[d(n), a]
    for a in range(3):
        mask3[a, np.arange(C) * PARAM_DIM + a] = 1.0
        td[a, :] = _T_NP[r_n] * _DIRS_NP[d_n, a]
    dec_aux = np.concatenate([mask3, td], axis=1)                          # [3, 128 + NTOT]

    return jnp.asarray(dec_m, jnp.float32), jnp.asarray(dec_aux, jnp.float32)


_DEC_M, _DEC_AUX = _build_decoder_constants()


# ----------------------------------------------------------------------------
# Jitted forward pass (single fused pallas_call)
# ----------------------------------------------------------------------------
_VMEM = pl.BlockSpec(memory_space=pltpu.MemorySpace.VMEM)


@jax.jit
def asdf_autoencoder_forward(points, slab):
    # TODO(synk): `idxs` point-subset selection of the original ASDFEncoder is not reconstructed.
    assert points.shape[0] == 1
    pts = jnp.pad(points[0], ((0, 0), (0, 8 - 3)))                         # [N, 8] zero-padded xyz
    out = pl.pallas_call(
        _asdf_fused_kernel,
        out_shape=jax.ShapeDtypeStruct((3, NTOT), jnp.float32),
        in_specs=[_VMEM, _VMEM, _VMEM, _VMEM],
        out_specs=_VMEM,
    )(pts, slab, _DEC_M, _DEC_AUX)
    # [3, C*R*D] -> [1, C*R*D, 3]; row n = c*R*D + r*D + d matches a [C,R,D,3] flatten.
    return jnp.transpose(out)[None, :, :]


# ----------------------------------------------------------------------------
# Pure-JAX reference (same reconstructed semantics) for a correctness check
# ----------------------------------------------------------------------------
def _reference_forward(points, params):
    pts = points[0]                                                        # [N, 3]
    h1 = jax.nn.relu(pts @ params["w1"] + params["b1"])
    h2 = jax.nn.relu(h1 @ params["w2"] + params["b2"])
    g = jnp.max(h2, axis=0)
    head = g @ params["w3"] + params["b3"]                                 # [C*P]
    ap = head.reshape(C, PARAM_DIM)
    centers, coeffs = ap[:, :3], ap[:, 3:]
    basis_t = jnp.asarray(_BASIS_NP.T, jnp.float32)                        # [K, D]
    dirs = jnp.asarray(_DIRS_NP, jnp.float32)                              # [D, 3]
    t = jnp.asarray(_T_NP, jnp.float32)                                    # [R]
    rho = jnp.abs(coeffs @ basis_t)                                        # [C, D]
    pts_out = (centers[:, None, None, :]
               + (t[None, :, None, None] * rho[:, None, :, None]) * dirs[None, None, :, :])
    return pts_out.reshape(1, -1, 3)                                       # [1, C*R*D, 3]


# ----------------------------------------------------------------------------
# Main
# ----------------------------------------------------------------------------
if __name__ == "__main__":
    key = jax.random.PRNGKey(0)
    k_pts, k_par = jax.random.split(key)
    points = jax.random.normal(k_pts, (1, N_POINTS, 3), jnp.float32)
    params = init_params(k_par)
    slab = jax.block_until_ready(pack_params(params))                      # one-time packing

    out = asdf_autoencoder_forward(points, slab)
    out = jax.block_until_ready(out)

    expected = (1, C * R * D, 3)
    assert out.shape == expected, f"bad shape {out.shape} != {expected}"
    assert bool(jnp.all(jnp.isfinite(out)))

    ref = _reference_forward(points, params)
    max_err = float(jnp.max(jnp.abs(out - ref)))
    assert max_err < 1e-4, f"mismatch vs reference: max abs err {max_err}"

    print("KERNEL_OK")
</pallas_src>

<mosaic_0001>
module attributes {stable_mosaic.version = 11 : i64} {
  func.func @_asdf_fused_kernel(%arg0: memref<64x8xf32, #tpu.memory_space<vmem>>, %arg1: memref<288x128xf32, #tpu.memory_space<vmem>>, %arg2: memref<128x1280xf32, #tpu.memory_space<vmem>>, %arg3: memref<3x768xf32, #tpu.memory_space<vmem>>, %arg4: memref<3x640xf32, #tpu.memory_space<vmem>>) attributes {dimension_semantics = [], scalar_prefetch = 0 : i64, scratch_operands = 0 : i64, tpu.core_type = #tpu.core_type<tc>} {
    %c0 = arith.constant 0 : index
    %c0_0 = arith.constant 0 : index
    %0 = vector.load %arg0[%c0, %c0_0] : memref<64x8xf32, #tpu.memory_space<vmem>>, vector<64x8xf32>
    %c0_1 = arith.constant 0 : index
    %c0_2 = arith.constant 0 : index
    %1 = vector.load %arg1[%c0_1, %c0_2] : memref<288x128xf32, #tpu.memory_space<vmem>>, vector<8x128xf32>
    %cst = arith.constant dense<0.000000e+00> : vector<64x128xf32>
    %2 = tpu.matmul %0, %1, %cst {dimension_numbers = #tpu.dot_dimension_numbers<[1], [0], [0], [1], [0, 0, 1, 1], [], []>} : vector<64x8xf32>, vector<8x128xf32>, vector<64x128xf32> -> vector<64x128xf32>
    %c8 = arith.constant 8 : index
    %c0_3 = arith.constant 0 : index
    %3 = vector.load %arg1[%c8, %c0_3] : memref<288x128xf32, #tpu.memory_space<vmem>>, vector<1x128xf32>
    %4 = vector.broadcast %3 : vector<1x128xf32> to vector<64x128xf32>
    %5 = arith.addf %2, %4 : vector<64x128xf32>
    %cst_4 = arith.constant 0.000000e+00 : f32
    %6 = vector.broadcast %cst_4 : f32 to vector<64x128xf32>
    %7 = arith.maximumf %5, %6 : vector<64x128xf32>
    %c16 = arith.constant 16 : index
    %c0_5 = arith.constant 0 : index
    %8 = vector.load %arg1[%c16, %c0_5] : memref<288x128xf32, #tpu.memory_space<vmem>>, vector<128x128xf32>
    %cst_6 = arith.constant dense<0.000000e+00> : vector<64x128xf32>
    %9 = tpu.matmul %7, %8, %cst_6 {dimension_numbers = #tpu.dot_dimension_numbers<[1], [0], [0], [1], [0, 0, 1, 1], [], []>} : vector<64x128xf32>, vector<128x128xf32>, vector<64x128xf32> -> vector<64x128xf32>
    %c144 = arith.constant 144 : index
    %c0_7 = arith.constant 0 : index
    %10 = vector.load %arg1[%c144, %c0_7] : memref<288x128xf32, #tpu.memory_space<vmem>>, vector<1x128xf32>
    %11 = vector.broadcast %10 : vector<1x128xf32> to vector<64x128xf32>
    %12 = arith.addf %9, %11 : vector<64x128xf32>
    %cst_8 = arith.constant 0.000000e+00 : f32
    %13 = vector.broadcast %cst_8 : f32 to vector<64x128xf32>
    %14 = arith.maximumf %12, %13 : vector<64x128xf32>
    %cst_9 = arith.constant dense<0xFF800000> : vector<128xf32>
    %15 = vector.multi_reduction <maximumf>, %14, %cst_9 [0] : vector<64x128xf32> to vector<128xf32>
    %16 = vector.shape_cast %15 : vector<128xf32> to vector<1x128xf32>
    %c152 = arith.constant 152 : index
    %c0_10 = arith.constant 0 : index
    %17 = vector.load %arg1[%c152, %c0_10] : memref<288x128xf32, #tpu.memory_space<vmem>>, vector<128x128xf32>
    %cst_11 = arith.constant dense<0.000000e+00> : vector<1x128xf32>
    %18 = tpu.matmul %16, %17, %cst_11 {dimension_numbers = #tpu.dot_dimension_numbers<[1], [0], [0], [1], [0, 0, 1, 1], [], []>} : vector<1x128xf32>, vector<128x128xf32>, vector<1x128xf32> -> vector<1x128xf32>
    %c280 = arith.constant 280 : index
    %c0_12 = arith.constant 0 : index
    %19 = vector.load %arg1[%c280, %c0_12] : memref<288x128xf32, #tpu.memory_space<vmem>>, vector<1x128xf32>
    %20 = arith.addf %18, %19 : vector<1x128xf32>
    %c0_13 = arith.constant 0 : index
    %c0_14 = arith.constant 0 : index
    %21 = vector.load %arg2[%c0_13, %c0_14] : memref<128x1280xf32, #tpu.memory_space<vmem>>, vector<128x640xf32>
    %cst_15 = arith.constant dense<0.000000e+00> : vector<1x640xf32>
    %22 = tpu.matmul %20, %21, %cst_15 {dimension_numbers = #tpu.dot_dimension_numbers<[1], [0], [0], [1], [0, 0, 1, 1], [], []>} : vector<1x128xf32>, vector<128x640xf32>, vector<1x640xf32> -> vector<1x640xf32>
    %23 = math.absf %22 : vector<1x640xf32>
    %c0_16 = arith.constant 0 : index
    %c0_17 = arith.constant 0 : index
    %24 = vector.load %arg3[%c0_16, %c0_17] : memref<3x768xf32, #tpu.memory_space<vmem>>, vector<3x128xf32>
    %25 = vector.broadcast %20 : vector<1x128xf32> to vector<3x128xf32>
    %26 = arith.mulf %25, %24 : vector<3x128xf32>
    %c0_18 = arith.constant 0 : index
    %c640 = arith.constant 640 : index
    %27 = vector.load %arg2[%c0_18, %c640] : memref<128x1280xf32, #tpu.memory_space<vmem>>, vector<128x640xf32>
    %cst_19 = arith.constant dense<0.000000e+00> : vector<3x640xf32>
    %28 = tpu.matmul %26, %27, %cst_19 {dimension_numbers = #tpu.dot_dimension_numbers<[1], [0], [0], [1], [0, 0, 1, 1], [], []>} : vector<3x128xf32>, vector<128x640xf32>, vector<3x640xf32> -> vector<3x640xf32>
    %c0_20 = arith.constant 0 : index
    %c128 = arith.constant 128 : index
    %29 = vector.load %arg3[%c0_20, %c128] : memref<3x768xf32, #tpu.memory_space<vmem>>, vector<3x640xf32>
    %30 = vector.broadcast %23 : vector<1x640xf32> to vector<3x640xf32>
    %31 = arith.mulf %30, %29 : vector<3x640xf32>
    %32 = arith.addf %28, %31 : vector<3x640xf32>
    %c0_21 = arith.constant 0 : index
    %c0_22 = arith.constant 0 : index
    %33 = vector.load %arg4[%c0_21, %c0_22] : memref<3x640xf32, #tpu.memory_space<vmem>>, vector<3x640xf32>
    tpu.vector_store %arg4[%c0_21, %c0_22], %32 {strides = array<i32>} : memref<3x640xf32, #tpu.memory_space<vmem>>, vector<3x640xf32>,
    return
  }
}

</mosaic_0001>

<llo_original>
// kernel: asdf_autoencoder_forward.1
$region0: #{asdf_autoencoder_forward.1}
  #allocation0 [shape = 'u32[]', space=smem, size = 0x4, offset = 0x4, fixed_abs, tag = 'smem constant byte address 0x4 - core index']
  #allocation1 [shape = 'u32[144,128]{1,0:T(1,128)}', space=vmem, size = 0x12000, scoped, tag = 'internal scratch']
  %s0 = inlined_call_operand.vmem [shape: f32[64,8], index: 0, kind: input, shape index: {}]
  %s1 = inlined_call_operand.hbm [shape: f32[288,128], index: 1, kind: input, shape index: {}]
  %s2 = inlined_call_operand.hbm [shape: f32[128,1280], index: 2, kind: input, shape index: {}]
  %s3 = inlined_call_operand.vmem [shape: f32[3,768], index: 3, kind: input, shape index: {}]
  %s4 = inlined_call_operand.vmem [shape: f32[3,640], index: 4, kind: output, shape index: {}]
  %s5 = sld [smem:[#allocation0]]
  $region34: #{asdf_autoencoder_forward.1} parent=0
    _
  %s7 = ssub.s32 1, %s5
  %s8 = scalar_select 0, %s7, %s5
  $region1: #{asdf_autoencoder_forward.1} parent=0
    #allocation2 [shape = 'u8[147456]{0}', space=vmem, size = 0x24000, scoped, tag = 'input window, operand 1, single buffered']
    #allocation3 [shape = 's32[1]{0}', space=sflag, size = 0x4, scoped, tag = 'scoped memory for asdf_autoencoder_forward.1']
    #allocation4 [shape = 'u8[655360]{0}', space=vmem, size = 0xa0000, scoped, tag = 'input window, operand 2, single buffered']
    #allocation5 [shape = 's32[1]{0}', space=sflag, size = 0x4, scoped, tag = 'scoped memory for asdf_autoencoder_forward.1']
    %9 = vsyncpa [#allocation3], 0
    %10 = vsyncpa [#allocation5], 0
    // Predicated region
    $region2: #{asdf_autoencoder_forward.1} parent=1 // pred_check
      _
    $region3: #{asdf_autoencoder_forward.1} parent=1 // pred_check_branch
      %12 = sbr.rel (0) target = $region5
    $region4: #{asdf_autoencoder_forward.1} parent=1 // pred_region
      _
    $region5: #{asdf_autoencoder_forward.1} parent=1 // pred_fallthru
      _
    // Predicated region
    $region6: #{asdf_autoencoder_forward.1} parent=1 // pred_check
      _
    $region7: #{asdf_autoencoder_forward.1} parent=1 // pred_check_branch
      %14 = sbr.rel (0) target = $region9
    $region8: #{asdf_autoencoder_forward.1} parent=1 // pred_region
      %s16 = ssub.s32 4608, 4608
      %17 = vsyncadd [#allocation3], %s16
      %s18 = sshll.u32 [#allocation2], 4
      %s19 = int_to_ptr.vmem [resolvable:$true] %s18
      %24 = dma.hbm_to_vmem [thread:$0]  %s1, 4608, %s19, [#allocation3], 128, 128, 8
    $region9: #{asdf_autoencoder_forward.1} parent=1 // pred_fallthru
      _
    // Predicated region
    $region10: #{asdf_autoencoder_forward.1} parent=1 // pred_check
      _
    $region11: #{asdf_autoencoder_forward.1} parent=1 // pred_check_branch
      %26 = sbr.rel (0) target = $region13
    $region12: #{asdf_autoencoder_forward.1} parent=1 // pred_region
      %s28 = ssub.s32 20480, 20480
      %29 = vsyncadd [#allocation5], %s28
      %s30 = sshll.u32 [#allocation4], 4
      %s31 = int_to_ptr.vmem [resolvable:$true] %s30
      %36 = dma.hbm_to_vmem [thread:$0]  %s2, 20480, %s31, [#allocation5], 1280, 1280, 80
    $region13: #{asdf_autoencoder_forward.1} parent=1 // pred_fallthru
      _
    // Predicated region
    $region14: #{asdf_autoencoder_forward.1} parent=1 // pred_check
      _
    $region15: #{asdf_autoencoder_forward.1} parent=1 // pred_check_branch
      %38 = sbr.rel (0) target = $region17
    $region16: #{asdf_autoencoder_forward.1} parent=1 // pred_region
      _
    $region17: #{asdf_autoencoder_forward.1} parent=1 // pred_fallthru
      _
    // Predicated region
    $region18: #{asdf_autoencoder_forward.1} parent=1 // pred_check
      _
    $region19: #{asdf_autoencoder_forward.1} parent=1 // pred_check_branch
      %40 = sbr.rel (0) target = $region21
    $region20: #{asdf_autoencoder_forward.1} parent=1 // pred_region
      %41 = dma.done [#allocation3], 4608
    $region21: #{asdf_autoencoder_forward.1} parent=1 // pred_fallthru
      _
    // Predicated region
    $region22: #{asdf_autoencoder_forward.1} parent=1 // pred_check
      _
    $region23: #{asdf_autoencoder_forward.1} parent=1 // pred_check_branch
      %43 = sbr.rel (0) target = $region25
    $region24: #{asdf_autoencoder_forward.1} parent=1 // pred_region
      %44 = dma.done [#allocation5], 20480
    $region25: #{asdf_autoencoder_forward.1} parent=1 // pred_fallthru
      _
    %v45 = vld [vmem:[%s0] sm:$0xff]
    %v46 = vld [vmem:[%s0 + $0x8] sm:$0xff]
    %v47 = vld [vmem:[%s0 + $0x10] sm:$0xff]
    %v48 = vld [vmem:[%s0 + $0x18] sm:$0xff]
    %v49 = vld [vmem:[%s0 + $0x20] sm:$0xff]
    %v50 = vld [vmem:[%s0 + $0x28] sm:$0xff]
    %v51 = vld [vmem:[%s0 + $0x30] sm:$0xff]
    %v52 = vld [vmem:[%s0 + $0x38] sm:$0xff]
    %v53 = vld [vmem:[#allocation2] sm:$0xff]
    %v54 = vld [vmem:[#allocation2 + $0x8] sm:$0x1]
    %v55 = vlaneseq
    %v56 = vshrl.u32 %v55, 7
    %v57 = vsub.s32 0, %v56
    %v58 = vrot.slane %v54, %v57
    %vm59 = vcmask 64512
    %v61 = vsel %vm59, %v45, 0
    %v64 = vsel %vm59, %v46, 0
    %v67 = vsel %vm59, %v47, 0
    %v70 = vsel %vm59, %v48, 0
    %v73 = vsel %vm59, %v49, 0
    %v76 = vsel %vm59, %v50, 0
    %v79 = vsel %vm59, %v51, 0
    %v82 = vsel %vm59, %v52, 0
    %84 = vmatprep.subr.mxu0 0.0
    %85 = vmatpush1.msra.mxu0 %v53
    %86 = vmatprep.subr.mxu0 0.0
    %87 = vmatpush1.msra.mxu0 0.0
    %88 = vmatprep.subr.mxu0 0.0
    %89 = vmatpush1.msra.mxu0 0.0
    %90 = vmatprep.subr.mxu0 0.0
    %91 = vmatpush1.msra.mxu0 0.0
    %92 = vmatprep.subr.mxu0 0.0
    %93 = vmatpush1.msra.mxu0 0.0
    %94 = vmatprep.subr.mxu0 0.0
    %95 = vmatpush1.msra.mxu0 0.0
    %96 = vmatprep.subr.mxu0 0.0
    %97 = vmatpush1.msra.mxu0 0.0
    %98 = vmatprep.subr.mxu0 0.0
    %99 = vmatpush1.msra.mxu0 0.0
    %100 = vmatprep.subr.mxu0 0.0
    %101 = vmatpush1.msra.mxu0 0.0
    %102 = vmatprep.subr.mxu0 0.0
    %103 = vmatpush1.msra.mxu0 0.0
    %104 = vmatprep.subr.mxu0 0.0
    %105 = vmatpush1.msra.mxu0 0.0
    %106 = vmatprep.subr.mxu0 0.0
    %107 = vmatpush1.msra.mxu0 0.0
    %108 = vmatprep.subr.mxu0 0.0
    %109 = vmatpush1.msra.mxu0 0.0
    %110 = vmatprep.subr.mxu0 0.0
    %111 = vmatpush1.msra.mxu0 0.0
    %112 = vmatprep.subr.mxu0 0.0
    %113 = vmatpush1.msra.mxu0 0.0
    %114 = vmatprep.subr.mxu0 0.0
    %115 = vmatpush1.msra.mxu0 0.0
    %116 = vmatprep.subr.mxu0 0.0
    %117 = vmatpush1.msra.mxu0 0.0
    %118 = vmatprep.subr.mxu0 0.0
    %119 = vmatpush1.msra.mxu0 0.0
    %120 = vmatprep.subr.mxu0 0.0
    %121 = vmatpush1.msra.mxu0 0.0
    %122 = vmatprep.subr.mxu0 0.0
    %123 = vmatpush1.msra.mxu0 0.0
    %124 = vmatprep.subr.mxu0 0.0
    %125 = vmatpush1.msra.mxu0 0.0
    %126 = vmatprep.subr.mxu0 0.0
    %127 = vmatpush1.msra.mxu0 0.0
    %128 = vmatprep.subr.mxu0 0.0
    %129 = vmatpush1.msra.mxu0 0.0
    %130 = vmatprep.subr.mxu0 0.0
    %131 = vmatpush1.msra.mxu0 0.0
    %132 = vmatprep.subr.mxu0 0.0
    %133 = vmatpush1.msra.mxu0 0.0
    %134 = vmatprep.subr.mxu0 0.0
    %135 = vmatpush1.msra.mxu0 0.0
    %136 = vmatprep.subr.mxu0 0.0
    %137 = vmatpush1.msra.mxu0 0.0
    %138 = vmatprep.subr.mxu0 0.0
    %139 = vmatpush1.msra.mxu0 0.0
    %140 = vmatprep.subr.mxu0 0.0
    %141 = vmatpush1.msra.mxu0 0.0
    %142 = vmatprep.subr.mxu0 0.0
    %143 = vmatpush1.msra.mxu0 0.0
    %144 = vmatprep.subr.mxu0 0.0
    %145 = vmatpush1.msra.mxu0 0.0
    %146 = vmatprep.subr.mxu0 0.0
    %147 = vmatpush1.msra.mxu0 0.0
    %148 = vmatprep.mubr.f32.mxu0 0.0
    %149 = vmatmul.mubr.f32.gmra.mrb[0].mxu0 %v61
    %v150 = vpop.f32.mrb[0].mxu0
    %v151 = vadd.f32 %v58, %v150
    %v152 = vpop.f32.mrb[0].mxu0
    %153 = vmatprep.mubr.f32.mxu0 0.0
    %154 = vmatmul.mubr.f32.gmra.mrb[0].mxu0 %v64
    %v155 = vpop.f32.mrb[0].mxu0
    %v156 = vadd.f32 %v58, %v155
    %v157 = vpop.f32.mrb[0].mxu0
    %158 = vmatprep.mubr.f32.mxu0 0.0
    %159 = vmatmul.mubr.f32.gmra.mrb[0].mxu0 %v67
    %v160 = vpop.f32.mrb[0].mxu0
    %v161 = vadd.f32 %v58, %v160
    %v162 = vpop.f32.mrb[0].mxu0
    %163 = vmatprep.mubr.f32.mxu0 0.0
    %164 = vmatmul.mubr.f32.gmra.mrb[0].mxu0 %v70
    %v165 = vpop.f32.mrb[0].mxu0
    %v166 = vadd.f32 %v58, %v165
    %v167 = vpop.f32.mrb[0].mxu0
    %168 = vmatprep.mubr.f32.mxu0 0.0
    %169 = vmatmul.mubr.f32.gmra.mrb[0].mxu0 %v73
    %v170 = vpop.f32.mrb[0].mxu0
    %v171 = vadd.f32 %v58, %v170
    %v172 = vpop.f32.mrb[0].mxu0
    %173 = vmatprep.mubr.f32.mxu0 0.0
    %174 = vmatmul.mubr.f32.gmra.mrb[0].mxu0 %v76
    %v175 = vpop.f32.mrb[0].mxu0
    %v176 = vadd.f32 %v58, %v175
    %v177 = vpop.f32.mrb[0].mxu0
    %178 = vmatprep.mubr.f32.mxu0 0.0
    %179 = vmatmul.mubr.f32.gmra.mrb[0].mxu0 %v79
    %v180 = vpop.f32.mrb[0].mxu0
    %v181 = vadd.f32 %v58, %v180
    %v182 = vpop.f32.mrb[0].mxu0
    %183 = vmatprep.mubr.f32.mxu0 0.0
    %184 = vmatmul.mubr.f32.gmra.mrb[0].mxu0 %v82
    %v185 = vpop.f32.mrb[0].mxu0
    %v186 = vadd.f32 %v58, %v185
    %v187 = vpop.f32.mrb[0].mxu0
    %188 = vdwg.mxu0
    %v189 = vmax.f32 %v151, 0.0
    %v190 = vmax.f32 %v156, 0.0
    %v191 = vmax.f32 %v161, 0.0
    %v192 = vmax.f32 %v166, 0.0
    %v193 = vmax.f32 %v171, 0.0
    %v194 = vmax.f32 %v176, 0.0
    %v195 = vmax.f32 %v181, 0.0
    %v196 = vmax.f32 %v186, 0.0
    %v197 = vld [vmem:[#allocation2 + $0x10] sm:$0xff]
    %v198 = vld [vmem:[#allocation2 + $0x18] sm:$0xff]
    %v199 = vld [vmem:[#allocation2 + $0x20] sm:$0xff]
    %v200 = vld [vmem:[#allocation2 + $0x28] sm:$0xff]
    %v201 = vld [vmem:[#allocation2 + $0x30] sm:$0xff]
    %v202 = vld [vmem:[#allocation2 + $0x38] sm:$0xff]
    %v203 = vld [vmem:[#allocation2 + $0x40] sm:$0xff]
    %v204 = vld [vmem:[#allocation2 + $0x48] sm:$0xff]
    %v205 = vld [vmem:[#allocation2 + $0x50] sm:$0xff]
    %v206 = vld [vmem:[#allocation2 + $0x58] sm:$0xff]
    %v207 = vld [vmem:[#allocation2 + $0x60] sm:$0xff]
    %v208 = vld [vmem:[#allocation2 + $0x68] sm:$0xff]
    %v209 = vld [vmem:[#allocation2 + $0x70] sm:$0xff]
    %v210 = vld [vmem:[#allocation2 + $0x78] sm:$0xff]
    %v211 = vld [vmem:[#allocation2 + $0x80] sm:$0xff]
    %v212 = vld [vmem:[#allocation2 + $0x88] sm:$0xff]
    %v213 = vld [vmem:[#allocation2 + $0x90] sm:$0x1]
    %v214 = vlaneseq
    %v215 = vshrl.u32 %v214, 7
    %v216 = vsub.s32 0, %v215
    %v217 = vrot.slane %v213, %v216
    %218 = vmatprep.subr.mxu0 0.0
    %219 = vmatpush1.msra.mxu0 %v197
    %220 = vmatprep.subr.mxu0 0.0
    %221 = vmatpush1.msra.mxu0 %v198
    %222 = vmatprep.subr.mxu0 0.0
    %223 = vmatpush1.msra.mxu0 %v199
    %224 = vmatprep.subr.mxu0 0.0
    %225 = vmatpush1.msra.mxu0 %v200
    %226 = vmatprep.subr.mxu0 0.0
    %227 = vmatpush1.msra.mxu0 %v201
    %228 = vmatprep.subr.mxu0 0.0
    %229 = vmatpush1.msra.mxu0 %v202
    %230 = vmatprep.subr.mxu0 0.0
    %231 = vmatpush1.msra.mxu0 %v203
    %232 = vmatprep.subr.mxu0 0.0
    %233 = vmatpush1.msra.mxu0 %v204
    %234 = vmatprep.subr.mxu0 0.0
    %235 = vmatpush1.msra.mxu0 %v205
    %236 = vmatprep.subr.mxu0 0.0
    %237 = vmatpush1.msra.mxu0 %v206
    %238 = vmatprep.subr.mxu0 0.0
    %239 = vmatpush1.msra.mxu0 %v207
    %240 = vmatprep.subr.mxu0 0.0
    %241 = vmatpush1.msra.mxu0 %v208
    %242 = vmatprep.subr.mxu0 0.0
    %243 = vmatpush1.msra.mxu0 %v209
    %244 = vmatprep.subr.mxu0 0.0
    %245 = vmatpush1.msra.mxu0 %v210
    %246 = vmatprep.subr.mxu0 0.0
    %247 = vmatpush1.msra.mxu0 %v211
    %248 = vmatprep.subr.mxu0 0.0
    %249 = vmatpush1.msra.mxu0 %v212
    %250 = vmatprep.subr.mxu0 0.0
    %251 = vmatpush1.msra.mxu0 0.0
    %252 = vmatprep.subr.mxu0 0.0
    %253 = vmatpush1.msra.mxu0 0.0
    %254 = vmatprep.subr.mxu0 0.0
    %255 = vmatpush1.msra.mxu0 0.0
    %256 = vmatprep.subr.mxu0 0.0
    %257 = vmatpush1.msra.mxu0 0.0
    %258 = vmatprep.subr.mxu0 0.0
    %259 = vmatpush1.msra.mxu0 0.0
    %260 = vmatprep.subr.mxu0 0.0
    %261 = vmatpush1.msra.mxu0 0.0
    %262 = vmatprep.subr.mxu0 0.0
    %263 = vmatpush1.msra.mxu0 0.0
    %264 = vmatprep.subr.mxu0 0.0
    %265 = vmatpush1.msra.mxu0 0.0
    %266 = vmatprep.subr.mxu0 0.0
    %267 = vmatpush1.msra.mxu0 0.0
    %268 = vmatprep.subr.mxu0 0.0
    %269 = vmatpush1.msra.mxu0 0.0
    %270 = vmatprep.subr.mxu0 0.0
    %271 = vmatpush1.msra.mxu0 0.0
    %272 = vmatprep.subr.mxu0 0.0
    %273 = vmatpush1.msra.mxu0 0.0
    %274 = vmatprep.subr.mxu0 0.0
    %275 = vmatpush1.msra.mxu0 0.0
    %276 = vmatprep.subr.mxu0 0.0
    %277 = vmatpush1.msra.mxu0 0.0
    %278 = vmatprep.subr.mxu0 0.0
    %279 = vmatpush1.msra.mxu0 0.0
    %280 = vmatprep.subr.mxu0 0.0
    %281 = vmatpush1.msra.mxu0 0.0
    %282 = vmatprep.mubr.f32.mxu0 0.0
    %283 = vmatmul.mubr.f32.gmra.mrb[0].mxu0 %v189
    %v284 = vpop.f32.mrb[0].mxu0
    %v285 = vadd.f32 %v217, %v284
    %v286 = vpop.f32.mrb[0].mxu0
    %287 = vmatprep.mubr.f32.mxu0 0.0
    %288 = vmatmul.mubr.f32.gmra.mrb[0].mxu0 %v190
    %v289 = vpop.f32.mrb[0].mxu0
    %v290 = vadd.f32 %v217, %v289
    %v291 = vpop.f32.mrb[0].mxu0
    %292 = vmatprep.mubr.f32.mxu0 0.0
    %293 = vmatmul.mubr.f32.gmra.mrb[0].mxu0 %v191
    %v294 = vpop.f32.mrb[0].mxu0
    %v295 = vadd.f32 %v217, %v294
    %v296 = vpop.f32.mrb[0].mxu0
    %297 = vmatprep.mubr.f32.mxu0 0.0
    %298 = vmatmul.mubr.f32.gmra.mrb[0].mxu0 %v192
    %v299 = vpop.f32.mrb[0].mxu0
    %v300 = vadd.f32 %v217, %v299
    %v301 = vpop.f32.mrb[0].mxu0
    %302 = vmatprep.mubr.f32.mxu0 0.0
    %303 = vmatmul.mubr.f32.gmra.mrb[0].mxu0 %v193
    %v304 = vpop.f32.mrb[0].mxu0
    %v305 = vadd.f32 %v217, %v304
    %v306 = vpop.f32.mrb[0].mxu0
    %307 = vmatprep.mubr.f32.mxu0 0.0
    %308 = vmatmul.mubr.f32.gmra.mrb[0].mxu0 %v194
    %v309 = vpop.f32.mrb[0].mxu0
    %v310 = vadd.f32 %v217, %v309
    %v311 = vpop.f32.mrb[0].mxu0
    %312 = vmatprep.mubr.f32.mxu0 0.0
    %313 = vmatmul.mubr.f32.gmra.mrb[0].mxu0 %v195
    %v314 = vpop.f32.mrb[0].mxu0
    %v315 = vadd.f32 %v217, %v314
    %v316 = vpop.f32.mrb[0].mxu0
    %317 = vmatprep.mubr.f32.mxu0 0.0
    %318 = vmatmul.mubr.f32.gmra.mrb[0].mxu0 %v196
    %v319 = vpop.f32.mrb[0].mxu0
    %v320 = vadd.f32 %v217, %v319
    %v321 = vpop.f32.mrb[0].mxu0
    %322 = vdwg.mxu0
    %v323 = vmax.f32 %v285, 0.0
    %v324 = vmax.f32 %v290, 0.0
    %v325 = vmax.f32 %v295, 0.0
    %v326 = vmax.f32 %v300, 0.0
    %v327 = vmax.f32 %v305, 0.0
    %v328 = vmax.f32 %v310, 0.0
    %v329 = vmax.f32 %v315, 0.0
    %v330 = vmax.f32 %v320, 0.0
    %v331 = vmax.f32 %v323, %v327
    %v332 = vmax.f32 %v324, %v328
    %v333 = vmax.f32 %v325, %v329
    %v334 = vmax.f32 %v326, %v330
    %v335 = vmax.f32 %v331, %v332
    %v336 = vmax.f32 %v333, %v334
    %v337 = vmax.f32 %v335, %v336
    %v338 = vrot.slane %v337, 4
    %v339 = vmax.f32 %v337, %v338
    %v340 = vrot.slane %v339, 2
    %v341 = vmax.f32 %v339, %v340
    %v342 = vrot.slane %v341, 1
    %v343 = vmax.f32 %v341, %v342
    %v344 = vld [vmem:[#allocation2 + $0x98] sm:$0xff]
    %v345 = vld [vmem:[#allocation2 + $0xa0] sm:$0xff]
    %v346 = vld [vmem:[#allocation2 + $0xa8] sm:$0xff]
    %v347 = vld [vmem:[#allocation2 + $0xb0] sm:$0xff]
    %v348 = vld [vmem:[#allocation2 + $0xb8] sm:$0xff]
    %v349 = vld [vmem:[#allocation2 + $0xc0] sm:$0xff]
    %v350 = vld [vmem:[#allocation2 + $0xc8] sm:$0xff]
    %v351 = vld [vmem:[#allocation2 + $0xd0] sm:$0xff]
    %v352 = vld [vmem:[#allocation2 + $0xd8] sm:$0xff]
    %v353 = vld [vmem:[#allocation2 + $0xe0] sm:$0xff]
    %v354 = vld [vmem:[#allocation2 + $0xe8] sm:$0xff]
    %v355 = vld [vmem:[#allocation2 + $0xf0] sm:$0xff]
    %v356 = vld [vmem:[#allocation2 + $0xf8] sm:$0xff]
    %v357 = vld [vmem:[#allocation2 + $0x100] sm:$0xff]
    %v358 = vld [vmem:[#allocation2 + $0x108] sm:$0xff]
    %v359 = vld [vmem:[#allocation2 + $0x110] sm:$0xff]
    %v360 = vld [vmem:[#allocation2 + $0x118] sm:$0x1]
    %361 = vmatprep.subr.mxu0 0.0
    %362 = vmatpush1.msra.mxu0 %v344
    %363 = vmatprep.subr.mxu0 0.0
    %364 = vmatpush1.msra.mxu0 %v345
    %365 = vmatprep.subr.mxu0 0.0
    %366 = vmatpush1.msra.mxu0 %v346
    %367 = vmatprep.subr.mxu0 0.0
    %368 = vmatpush1.msra.mxu0 %v347
    %369 = vmatprep.subr.mxu0 0.0
    %370 = vmatpush1.msra.mxu0 %v348
    %371 = vmatprep.subr.mxu0 0.0
    %372 = vmatpush1.msra.mxu0 %v349
    %373 = vmatprep.subr.mxu0 0.0
    %374 = vmatpush1.msra.mxu0 %v350
    %375 = vmatprep.subr.mxu0 0.0
    %376 = vmatpush1.msra.mxu0 %v351
    %377 = vmatprep.subr.mxu0 0.0
    %378 = vmatpush1.msra.mxu0 %v352
    %379 = vmatprep.subr.mxu0 0.0
    %380 = vmatpush1.msra.mxu0 %v353
    %381 = vmatprep.subr.mxu0 0.0
    %382 = vmatpush1.msra.mxu0 %v354
    %383 = vmatprep.subr.mxu0 0.0
    %384 = vmatpush1.msra.mxu0 %v355
    %385 = vmatprep.subr.mxu0 0.0
    %386 = vmatpush1.msra.mxu0 %v356
    %387 = vmatprep.subr.mxu0 0.0
    %388 = vmatpush1.msra.mxu0 %v357
    %389 = vmatprep.subr.mxu0 0.0
    %390 = vmatpush1.msra.mxu0 %v358
    %391 = vmatprep.subr.mxu0 0.0
    %392 = vmatpush1.msra.mxu0 %v359
    %393 = vmatprep.subr.mxu0 0.0
    %394 = vmatpush1.msra.mxu0 0.0
    %395 = vmatprep.subr.mxu0 0.0
    %396 = vmatpush1.msra.mxu0 0.0
    %397 = vmatprep.subr.mxu0 0.0
    %398 = vmatpush1.msra.mxu0 0.0
    %399 = vmatprep.subr.mxu0 0.0
    %400 = vmatpush1.msra.mxu0 0.0
    %401 = vmatprep.subr.mxu0 0.0
    %402 = vmatpush1.msra.mxu0 0.0
    %403 = vmatprep.subr.mxu0 0.0
    %404 = vmatpush1.msra.mxu0 0.0
    %405 = vmatprep.subr.mxu0 0.0
    %406 = vmatpush1.msra.mxu0 0.0
    %407 = vmatprep.subr.mxu0 0.0
    %408 = vmatpush1.msra.mxu0 0.0
    %409 = vmatprep.subr.mxu0 0.0
    %410 = vmatpush1.msra.mxu0 0.0
    %411 = vmatprep.subr.mxu0 0.0
    %412 = vmatpush1.msra.mxu0 0.0
    %413 = vmatprep.subr.mxu0 0.0
    %414 = vmatpush1.msra.mxu0 0.0
    %415 = vmatprep.subr.mxu0 0.0
    %416 = vmatpush1.msra.mxu0 0.0
    %417 = vmatprep.subr.mxu0 0.0
    %418 = vmatpush1.msra.mxu0 0.0
    %419 = vmatprep.subr.mxu0 0.0
    %420 = vmatpush1.msra.mxu0 0.0
    %421 = vmatprep.subr.mxu0 0.0
    %422 = vmatpush1.msra.mxu0 0.0
    %423 = vmatprep.subr.mxu0 0.0
    %424 = vmatpush1.msra.mxu0 0.0
    %425 = vmatprep.mubr.f32.mxu0 0.0
    %426 = vmatmul.mubr.f32.gmra.mrb[0].mxu0 %v343
    %v427 = vpop.f32.mrb[0].mxu0
    %v428 = vadd.f32 %v360, %v427
    %v429 = vpop.f32.mrb[0].mxu0
    %430 = vdwg.mxu0
    %v431 = vld [vmem:[#allocation4] sm:$0xff]
    %v432 = vld [vmem:[#allocation4 + $0x8] sm:$0xff]
    %v433 = vld [vmem:[#allocation4 + $0x10] sm:$0xff]
    %v434 = vld [vmem:[#allocation4 + $0x18] sm:$0xff]
    %v435 = vld [vmem:[#allocation4 + $0x20] sm:$0xff]
    %v436 = vld [vmem:[#allocation4 + $0x50] sm:$0xff]
    %v437 = vld [vmem:[#allocation4 + $0x58] sm:$0xff]
    %v438 = vld [vmem:[#allocation4 + $0x60] sm:$0xff]
    %v439 = vld [vmem:[#allocation4 + $0x68] sm:$0xff]
    %v440 = vld [vmem:[#allocation4 + $0x70] sm:$0xff]
    %v441 = vld [vmem:[#allocation4 + $0xa0] sm:$0xff]
    %v442 = vld [vmem:[#allocation4 + $0xa8] sm:$0xff]
    %v443 = vld [vmem:[#allocation4 + $0xb0] sm:$0xff]
    %v444 = vld [vmem:[#allocation4 + $0xb8] sm:$0xff]
    %v445 = vld [vmem:[#allocation4 + $0xc0] sm:$0xff]
    %v446 = vld [vmem:[#allocation4 + $0xf0] sm:$0xff]
    %v447 = vld [vmem:[#allocation4 + $0xf8] sm:$0xff]
    %v448 = vld [vmem:[#allocation4 + $0x100] sm:$0xff]
    %v449 = vld [vmem:[#allocation4 + $0x108] sm:$0xff]
    %v450 = vld [vmem:[#allocation4 + $0x110] sm:$0xff]
    %v451 = vld [vmem:[#allocation4 + $0x140] sm:$0xff]
    %v452 = vld [vmem:[#allocation4 + $0x148] sm:$0xff]
    %v453 = vld [vmem:[#allocation4 + $0x150] sm:$0xff]
    %v454 = vld [vmem:[#allocation4 + $0x158] sm:$0xff]
    %v455 = vld [vmem:[#allocation4 + $0x160] sm:$0xff]
    %v456 = vld [vmem:[#allocation4 + $0x190] sm:$0xff]
    %v457 = vld [vmem:[#allocation4 + $0x198] sm:$0xff]
    %v458 = vld [vmem:[#allocation4 + $0x1a0] sm:$0xff]
    %v459 = vld [vmem:[#allocation4 + $0x1a8] sm:$0xff]
    %v460 = vld [vmem:[#allocation4 + $0x1b0] sm:$0xff]
    %v461 = vld [vmem:[#allocation4 + $0x1e0] sm:$0xff]
    %v462 = vld [vmem:[#allocation4 + $0x1e8] sm:$0xff]
    %v463 = vld [vmem:[#allocation4 + $0x1f0] sm:$0xff]
    %v464 = vld [vmem:[#allocation4 + $0x1f8] sm:$0xff]
    %v465 = vld [vmem:[#allocation4 + $0x200] sm:$0xff]
    %v466 = vld [vmem:[#allocation4 + $0x230] sm:$0xff]
    %v467 = vld [vmem:[#allocation4 + $0x238] sm:$0xff]
    %v468 = vld [vmem:[#allocation4 + $0x240] sm:$0xff]
    %v469 = vld [vmem:[#allocation4 + $0x248] sm:$0xff]
    %v470 = vld [vmem:[#allocation4 + $0x250] sm:$0xff]
    %v471 = vld [vmem:[#allocation4 + $0x280] sm:$0xff]
    %v472 = vld [vmem:[#allocation4 + $0x288] sm:$0xff]
    %v473 = vld [vmem:[#allocation4 + $0x290] sm:$0xff]
    %v474 = vld [vmem:[#allocation4 + $0x298] sm:$0xff]
    %v475 = vld [vmem:[#allocation4 + $0x2a0] sm:$0xff]
    %v476 = vld [vmem:[#allocation4 + $0x2d0] sm:$0xff]
    %v477 = vld [vmem:[#allocation4 + $0x2d8] sm:$0xff]
    %v478 = vld [vmem:[#allocation4 + $0x2e0] sm:$0xff]
    %v479 = vld [vmem:[#allocation4 + $0x2e8] sm:$0xff]
    %v480 = vld [vmem:[#allocation4 + $0x2f0] sm:$0xff]
    %v481 = vld [vmem:[#allocation4 + $0x320] sm:$0xff]
    %v482 = vld [vmem:[#allocation4 + $0x328] sm:$0xff]
    %v483 = vld [vmem:[#allocation4 + $0x330] sm:$0xff]
    %v484 = vld [vmem:[#allocation4 + $0x338] sm:$0xff]
    %v485 = vld [vmem:[#allocation4 + $0x340] sm:$0xff]
    %v486 = vld [vmem:[#allocation4 + $0x370] sm:$0xff]
    %v487 = vld [vmem:[#allocation4 + $0x378] sm:$0xff]
    %v488 = vld [vmem:[#allocation4 + $0x380] sm:$0xff]
    %v489 = vld [vmem:[#allocation4 + $0x388] sm:$0xff]
    %v490 = vld [vmem:[#allocation4 + $0x390] sm:$0xff]
    %v491 = vld [vmem:[#allocation4 + $0x3c0] sm:$0xff]
    %v492 = vld [vmem:[#allocation4 + $0x3c8] sm:$0xff]
    %v493 = vld [vmem:[#allocation4 + $0x3d0] sm:$0xff]
    %v494 = vld [vmem:[#allocation4 + $0x3d8] sm:$0xff]
    %v495 = vld [vmem:[#allocation4 + $0x3e0] sm:$0xff]
    %v496 = vld [vmem:[#allocation4 + $0x410] sm:$0xff]
    %v497 = vld [vmem:[#allocation4 + $0x418] sm:$0xff]
    %v498 = vld [vmem:[#allocation4 + $0x420] sm:$0xff]
    %v499 = vld [vmem:[#allocation4 + $0x428] sm:$0xff]
    %v500 = vld [vmem:[#allocation4 + $0x430] sm:$0xff]
    %v501 = vld [vmem:[#allocation4 + $0x460] sm:$0xff]
    %v502 = vld [vmem:[#allocation4 + $0x468] sm:$0xff]
    %v503 = vld [vmem:[#allocation4 + $0x470] sm:$0xff]
    %v504 = vld [vmem:[#allocation4 + $0x478] sm:$0xff]
    %v505 = vld [vmem:[#allocation4 + $0x480] sm:$0xff]
    %v506 = vld [vmem:[#allocation4 + $0x4b0] sm:$0xff]
    %v507 = vld [vmem:[#allocation4 + $0x4b8] sm:$0xff]
    %v508 = vld [vmem:[#allocation4 + $0x4c0] sm:$0xff]
    %v509 = vld [vmem:[#allocation4 + $0x4c8] sm:$0xff]
    %v510 = vld [vmem:[#allocation4 + $0x4d0] sm:$0xff]
    %511 = vmatprep.subr.mxu0 %v432
    %512 = vmatpush1.msra.mxu0 %v431
    %513 = vmatprep.subr.mxu0 %v437
    %514 = vmatpush1.msra.mxu0 %v436
    %515 = vmatprep.subr.mxu0 %v442
    %516 = vmatpush1.msra.mxu0 %v441
    %517 = vmatprep.subr.mxu0 %v447
    %518 = vmatpush1.msra.mxu0 %v446
    %519 = vmatprep.subr.mxu0 %v452
    %520 = vmatpush1.msra.mxu0 %v451
    %521 = vmatprep.subr.mxu0 %v457
    %522 = vmatpush1.msra.mxu0 %v456
    %523 = vmatprep.subr.mxu0 %v462
    %524 = vmatpush1.msra.mxu0 %v461
    %525 = vmatprep.subr.mxu0 %v467
    %526 = vmatpush1.msra.mxu0 %v466
    %527 = vmatprep.subr.mxu0 %v472
    %528 = vmatpush1.msra.mxu0 %v471
    %529 = vmatprep.subr.mxu0 %v477
    %530 = vmatpush1.msra.mxu0 %v476
    %531 = vmatprep.subr.mxu0 %v482
    %532 = vmatpush1.msra.mxu0 %v481
    %533 = vmatprep.subr.mxu0 %v487
    %534 = vmatpush1.msra.mxu0 %v486
    %535 = vmatprep.subr.mxu0 %v492
    %536 = vmatpush1.msra.mxu0 %v491
    %537 = vmatprep.subr.mxu0 %v497
    %538 = vmatpush1.msra.mxu0 %v496
    %539 = vmatprep.subr.mxu0 %v502
    %540 = vmatpush1.msra.mxu0 %v501
    %541 = vmatprep.subr.mxu0 %v507
    %542 = vmatpush1.msra.mxu0 %v506
    %543 = vmatprep.subr.mxu0 0.0
    %544 = vmatpush1.msra.mxu0 0.0
    %545 = vmatprep.subr.mxu0 0.0
    %546 = vmatpush1.msra.mxu0 0.0
    %547 = vmatprep.subr.mxu0 0.0
    %548 = vmatpush1.msra.mxu0 0.0
    %549 = vmatprep.subr.mxu0 0.0
    %550 = vmatpush1.msra.mxu0 0.0
    %551 = vmatprep.subr.mxu0 0.0
    %552 = vmatpush1.msra.mxu0 0.0
    %553 = vmatprep.subr.mxu0 0.0
    %554 = vmatpush1.msra.mxu0 0.0
    %555 = vmatprep.subr.mxu0 0.0
    %556 = vmatpush1.msra.mxu0 0.0
    %557 = vmatprep.subr.mxu0 0.0
    %558 = vmatpush1.msra.mxu0 0.0
    %559 = vmatprep.subr.mxu0 0.0
    %560 = vmatpush1.msra.mxu0 0.0
    %561 = vmatprep.subr.mxu0 0.0
    %562 = vmatpush1.msra.mxu0 0.0
    %563 = vmatprep.subr.mxu0 0.0
    %564 = vmatpush1.msra.mxu0 0.0
    %565 = vmatprep.subr.mxu0 0.0
    %566 = vmatpush1.msra.mxu0 0.0
    %567 = vmatprep.subr.mxu0 0.0
    %568 = vmatpush1.msra.mxu0 0.0
    %569 = vmatprep.subr.mxu0 0.0
    %570 = vmatpush1.msra.mxu0 0.0
    %571 = vmatprep.subr.mxu0 0.0
    %572 = vmatpush1.msra.mxu0 0.0
    %573 = vmatprep.subr.mxu0 0.0
    %574 = vmatpush1.msra.mxu0 0.0
    %575 = vmatprep.mubr.f32.mxu0 0.0
    %576 = vmatmul.mubr.f32.gmra.mrb[0].mxu0 %v428
    %v577 = vpop.f32.mrb[0].mxu0
    %v578 = vadd.f32 0.0, %v577
    %v579 = vpop.f32.mrb[0].mxu0
    %v580 = vadd.f32 0.0, %v579
    %581 = vdwg.mxu0
    %582 = vmatprep.subr.mxu0 %v434
    %583 = vmatpush1.msra.mxu0 %v433
    %584 = vmatprep.subr.mxu0 %v439
    %585 = vmatpush1.msra.mxu0 %v438
    %586 = vmatprep.subr.mxu0 %v444
    %587 = vmatpush1.msra.mxu0 %v443
    %588 = vmatprep.subr.mxu0 %v449
    %589 = vmatpush1.msra.mxu0 %v448
    %590 = vmatprep.subr.mxu0 %v454
    %591 = vmatpush1.msra.mxu0 %v453
    %592 = vmatprep.subr.mxu0 %v459
    %593 = vmatpush1.msra.mxu0 %v458
    %594 = vmatprep.subr.mxu0 %v464
    %595 = vmatpush1.msra.mxu0 %v463
    %596 = vmatprep.subr.mxu0 %v469
    %597 = vmatpush1.msra.mxu0 %v468
    %598 = vmatprep.subr.mxu0 %v474
    %599 = vmatpush1.msra.mxu0 %v473
    %600 = vmatprep.subr.mxu0 %v479
    %601 = vmatpush1.msra.mxu0 %v478
    %602 = vmatprep.subr.mxu0 %v484
    %603 = vmatpush1.msra.mxu0 %v483
    %604 = vmatprep.subr.mxu0 %v489
    %605 = vmatpush1.msra.mxu0 %v488
    %606 = vmatprep.subr.mxu0 %v494
    %607 = vmatpush1.msra.mxu0 %v493
    %608 = vmatprep.subr.mxu0 %v499
    %609 = vmatpush1.msra.mxu0 %v498
    %610 = vmatprep.subr.mxu0 %v504
    %611 = vmatpush1.msra.mxu0 %v503
    %612 = vmatprep.subr.mxu0 %v509
    %613 = vmatpush1.msra.mxu0 %v508
    %614 = vmatprep.subr.mxu0 0.0
    %615 = vmatpush1.msra.mxu0 0.0
    %616 = vmatprep.subr.mxu0 0.0
    %617 = vmatpush1.msra.mxu0 0.0
    %618 = vmatprep.subr.mxu0 0.0
    %619 = vmatpush1.msra.mxu0 0.0
    %620 = vmatprep.subr.mxu0 0.0
    %621 = vmatpush1.msra.mxu0 0.0
    %622 = vmatprep.subr.mxu0 0.0
    %623 = vmatpush1.msra.mxu0 0.0
    %624 = vmatprep.subr.mxu0 0.0
    %625 = vmatpush1.msra.mxu0 0.0
    %626 = vmatprep.subr.mxu0 0.0
    %627 = vmatpush1.msra.mxu0 0.0
    %628 = vmatprep.subr.mxu0 0.0
    %629 = vmatpush1.msra.mxu0 0.0
    %630 = vmatprep.subr.mxu0 0.0
    %631 = vmatpush1.msra.mxu0 0.0
    %632 = vmatprep.subr.mxu0 0.0
    %633 = vmatpush1.msra.mxu0 0.0
    %634 = vmatprep.subr.mxu0 0.0
    %635 = vmatpush1.msra.mxu0 0.0
    %636 = vmatprep.subr.mxu0 0.0
    %637 = vmatpush1.msra.mxu0 0.0
    %638 = vmatprep.subr.mxu0 0.0
    %639 = vmatpush1.msra.mxu0 0.0
    %640 = vmatprep.subr.mxu0 0.0
    %641 = vmatpush1.msra.mxu0 0.0
    %642 = vmatprep.subr.mxu0 0.0
    %643 = vmatpush1.msra.mxu0 0.0
    %644 = vmatprep.subr.mxu0 0.0
    %645 = vmatpush1.msra.mxu0 0.0
    %646 = vmatprep.mubr.f32.mxu0 0.0
    %647 = vmatmul.mubr.f32.gmra.mrb[0].mxu0 %v428
    %v648 = vpop.f32.mrb[0].mxu0
    %v649 = vadd.f32 0.0, %v648
    %v650 = vpop.f32.mrb[0].mxu0
    %v651 = vadd.f32 0.0, %v650
    %652 = vdwg.mxu0
    %653 = vmatprep.subr.mxu0 0.0
    %654 = vmatpush1.msra.mxu0 %v435
    %655 = vmatprep.subr.mxu0 0.0
    %656 = vmatpush1.msra.mxu0 %v440
    %657 = vmatprep.subr.mxu0 0.0
    %658 = vmatpush1.msra.mxu0 %v445
    %659 = vmatprep.subr.mxu0 0.0
    %660 = vmatpush1.msra.mxu0 %v450
    %661 = vmatprep.subr.mxu0 0.0
    %662 = vmatpush1.msra.mxu0 %v455
    %663 = vmatprep.subr.mxu0 0.0
    %664 = vmatpush1.msra.mxu0 %v460
    %665 = vmatprep.subr.mxu0 0.0
    %666 = vmatpush1.msra.mxu0 %v465
    %667 = vmatprep.subr.mxu0 0.0
    %668 = vmatpush1.msra.mxu0 %v470
    %669 = vmatprep.subr.mxu0 0.0
    %670 = vmatpush1.msra.mxu0 %v475
    %671 = vmatprep.subr.mxu0 0.0
    %672 = vmatpush1.msra.mxu0 %v480
    %673 = vmatprep.subr.mxu0 0.0
    %674 = vmatpush1.msra.mxu0 %v485
    %675 = vmatprep.subr.mxu0 0.0
    %676 = vmatpush1.msra.mxu0 %v490
    %677 = vmatprep.subr.mxu0 0.0
    %678 = vmatpush1.msra.mxu0 %v495
    %679 = vmatprep.subr.mxu0 0.0
    %680 = vmatpush1.msra.mxu0 %v500
    %681 = vmatprep.subr.mxu0 0.0
    %682 = vmatpush1.msra.mxu0 %v505
    %683 = vmatprep.subr.mxu0 0.0
    %684 = vmatpush1.msra.mxu0 %v510
    %685 = vmatprep.subr.mxu0 0.0
    %686 = vmatpush1.msra.mxu0 0.0
    %687 = vmatprep.subr.mxu0 0.0
    %688 = vmatpush1.msra.mxu0 0.0
    %689 = vmatprep.subr.mxu0 0.0
    %690 = vmatpush1.msra.mxu0 0.0
    %691 = vmatprep.subr.mxu0 0.0
    %692 = vmatpush1.msra.mxu0 0.0
    %693 = vmatprep.subr.mxu0 0.0
    %694 = vmatpush1.msra.mxu0 0.0
    %695 = vmatprep.subr.mxu0 0.0
    %696 = vmatpush1.msra.mxu0 0.0
    %697 = vmatprep.subr.mxu0 0.0
    %698 = vmatpush1.msra.mxu0 0.0
    %699 = vmatprep.subr.mxu0 0.0
    %700 = vmatpush1.msra.mxu0 0.0
    %701 = vmatprep.subr.mxu0 0.0
    %702 = vmatpush1.msra.mxu0 0.0
    %703 = vmatprep.subr.mxu0 0.0
    %704 = vmatpush1.msra.mxu0 0.0
    %705 = vmatprep.subr.mxu0 0.0
    %706 = vmatpush1.msra.mxu0 0.0
    %707 = vmatprep.subr.mxu0 0.0
    %708 = vmatpush1.msra.mxu0 0.0
    %709 = vmatprep.subr.mxu0 0.0
    %710 = vmatpush1.msra.mxu0 0.0
    %711 = vmatprep.subr.mxu0 0.0
    %712 = vmatpush1.msra.mxu0 0.0
    %713 = vmatprep.subr.mxu0 0.0
    %714 = vmatpush1.msra.mxu0 0.0
    %715 = vmatprep.subr.mxu0 0.0
    %716 = vmatpush1.msra.mxu0 0.0
    %717 = vmatprep.mubr.f32.mxu0 0.0
    %718 = vmatmul.mubr.f32.gmra.mrb[0].mxu0 %v428
    %v719 = vpop.f32.mrb[0].mxu0
    %v720 = vadd.f32 0.0, %v719
    %v721 = vpop.f32.mrb[0].mxu0
    %722 = vdwg.mxu0
    %v723 = vand.u32 2147483647, %v578
    %v724 = vand.u32 2147483647, %v580
    %v725 = vand.u32 2147483647, %v649
    %v726 = vand.u32 2147483647, %v651
    %v727 = vand.u32 2147483647, %v720
    %v728 = vld [vmem:[%s3] sm:$0x7]
    %v729 = vlaneseq
    %v730 = vshrl.u32 %v729, 7
    %v731 = vsub.s32 0, %v730
    %v732 = vrot.slane %v428, %v731
    %v733 = vmul.f32 %v732, %v728
    %v734 = vld [vmem:[#allocation4 + $0x28] sm:$0xff]
    %v735 = vld [vmem:[#allocation4 + $0x30] sm:$0xff]
    %v736 = vld [vmem:[#allocation4 + $0x38] sm:$0xff]
    %v737 = vld [vmem:[#allocation4 + $0x40] sm:$0xff]
    %v738 = vld [vmem:[#allocation4 + $0x48] sm:$0xff]
    %v739 = vld [vmem:[#allocation4 + $0x78] sm:$0xff]
    %v740 = vld [vmem:[#allocation4 + $0x80] sm:$0xff]
    %v741 = vld [vmem:[#allocation4 + $0x88] sm:$0xff]
    %v742 = vld [vmem:[#allocation4 + $0x90] sm:$0xff]
    %v743 = vld [vmem:[#allocation4 + $0x98] sm:$0xff]
    %v744 = vld [vmem:[#allocation4 + $0xc8] sm:$0xff]
    %v745 = vld [vmem:[#allocation4 + $0xd0] sm:$0xff]
    %v746 = vld [vmem:[#allocation4 + $0xd8] sm:$0xff]
    %v747 = vld [vmem:[#allocation4 + $0xe0] sm:$0xff]
    %v748 = vld [vmem:[#allocation4 + $0xe8] sm:$0xff]
    %v749 = vld [vmem:[#allocation4 + $0x118] sm:$0xff]
    %v750 = vld [vmem:[#allocation4 + $0x120] sm:$0xff]
    %v751 = vld [vmem:[#allocation4 + $0x128] sm:$0xff]
    %v752 = vld [vmem:[#allocation4 + $0x130] sm:$0xff]
    %v753 = vld [vmem:[#allocation4 + $0x138] sm:$0xff]
    %v754 = vld [vmem:[#allocation4 + $0x168] sm:$0xff]
    %v755 = vld [vmem:[#allocation4 + $0x170] sm:$0xff]
    %v756 = vld [vmem:[#allocation4 + $0x178] sm:$0xff]
    %v757 = vld [vmem:[#allocation4 + $0x180] sm:$0xff]
    %v758 = vld [vmem:[#allocation4 + $0x188] sm:$0xff]
    %v759 = vld [vmem:[#allocation4 + $0x1b8] sm:$0xff]
    %v760 = vld [vmem:[#allocation4 + $0x1c0] sm:$0xff]
    %v761 = vld [vmem:[#allocation4 + $0x1c8] sm:$0xff]
    %v762 = vld [vmem:[#allocation4 + $0x1d0] sm:$0xff]
    %v763 = vld [vmem:[#allocation4 + $0x1d8] sm:$0xff]
    %v764 = vld [vmem:[#allocation4 + $0x208] sm:$0xff]
    %v765 = vld [vmem:[#allocation4 + $0x210] sm:$0xff]
    %v766 = vld [vmem:[#allocation4 + $0x218] sm:$0xff]
    %v767 = vld [vmem:[#allocation4 + $0x220] sm:$0xff]
    %v768 = vld [vmem:[#allocation4 + $0x228] sm:$0xff]
    %v769 = vld [vmem:[#allocation4 + $0x258] sm:$0xff]
    %v770 = vld [vmem:[#allocation4 + $0x260] sm:$0xff]
    %v771 = vld [vmem:[#allocation4 + $0x268] sm:$0xff]
    %v772 = vld [vmem:[#allocation4 + $0x270] sm:$0xff]
    %v773 = vld [vmem:[#allocation4 + $0x278] sm:$0xff]
    %v774 = vld [vmem:[#allocation4 + $0x2a8] sm:$0xff]
    %v775 = vld [vmem:[#allocation4 + $0x2b0] sm:$0xff]
    %v776 = vld [vmem:[#allocation4 + $0x2b8] sm:$0xff]
    %v777 = vld [vmem:[#allocation4 + $0x2c0] sm:$0xff]
    %v778 = vld [vmem:[#allocation4 + $0x2c8] sm:$0xff]
    %v779 = vld [vmem:[#allocation4 + $0x2f8] sm:$0xff]
    %v780 = vld [vmem:[#allocation4 + $0x300] sm:$0xff]
    %v781 = vld [vmem:[#allocation4 + $0x308] sm:$0xff]
    %v782 = vld [vmem:[#allocation4 + $0x310] sm:$0xff]
    %v783 = vld [vmem:[#allocation4 + $0x318] sm:$0xff]
    %v784 = vld [vmem:[#allocation4 + $0x348] sm:$0xff]
    %v785 = vld [vmem:[#allocation4 + $0x350] sm:$0xff]
    %v786 = vld [vmem:[#allocation4 + $0x358] sm:$0xff]
    %v787 = vld [vmem:[#allocation4 + $0x360] sm:$0xff]
    %v788 = vld [vmem:[#allocation4 + $0x368] sm:$0xff]
    %v789 = vld [vmem:[#allocation4 + $0x398] sm:$0xff]
    %v790 = vld [vmem:[#allocation4 + $0x3a0] sm:$0xff]
    %v791 = vld [vmem:[#allocation4 + $0x3a8] sm:$0xff]
    %v792 = vld [vmem:[#allocation4 + $0x3b0] sm:$0xff]
    %v793 = vld [vmem:[#allocation4 + $0x3b8] sm:$0xff]
    %v794 = vld [vmem:[#allocation4 + $0x3e8] sm:$0xff]
    %v795 = vld [vmem:[#allocation4 + $0x3f0] sm:$0xff]
    %v796 = vld [vmem:[#allocation4 + $0x3f8] sm:$0xff]
    %v797 = vld [vmem:[#allocation4 + $0x400] sm:$0xff]
    %v798 = vld [vmem:[#allocation4 + $0x408] sm:$0xff]
    %v799 = vld [vmem:[#allocation4 + $0x438] sm:$0xff]
    %v800 = vld [vmem:[#allocation4 + $0x440] sm:$0xff]
    %v801 = vld [vmem:[#allocation4 + $0x448] sm:$0xff]
    %v802 = vld [vmem:[#allocation4 + $0x450] sm:$0xff]
    %v803 = vld [vmem:[#allocation4 + $0x458] sm:$0xff]
    %v804 = vld [vmem:[#allocation4 + $0x488] sm:$0xff]
    %v805 = vld [vmem:[#allocation4 + $0x490] sm:$0xff]
    %v806 = vld [vmem:[#allocation4 + $0x498] sm:$0xff]
    %v807 = vld [vmem:[#allocation4 + $0x4a0] sm:$0xff]
    %v808 = vld [vmem:[#allocation4 + $0x4a8] sm:$0xff]
    %v809 = vld [vmem:[#allocation4 + $0x4d8] sm:$0xff]
    %v810 = vld [vmem:[#allocation4 + $0x4e0] sm:$0xff]
    %v811 = vld [vmem:[#allocation4 + $0x4e8] sm:$0xff]
    %v812 = vld [vmem:[#allocation4 + $0x4f0] sm:$0xff]
    %v813 = vld [vmem:[#allocation4 + $0x4f8] sm:$0xff]
    %v814 = vld [vmem:[%s3 + $0x4] sm:$0x77]
    %v815 = vld [vmem:[%s3 + $0xc] sm:$0x77]
    %v816 = vld [vmem:[%s3 + $0x14] sm:$0x7]
    %v817 = vlaneseq
    %v818 = vshrl.u32 %v817, 7
    %v819 = vsub.s32 0, %v818
    %v820 = vrot.slane %v723, %v819
    %v821 = vlaneseq
    %v822 = vshrl.u32 %v821, 7
    %v823 = vsub.s32 0, %v822
    %v824 = vrot.slane %v724, %v823
    %v825 = vlaneseq
    %v826 = vshrl.u32 %v825, 7
    %v827 = vsub.s32 0, %v826
    %v828 = vrot.slane %v725, %v827
    %v829 = vlaneseq
    %v830 = vshrl.u32 %v829, 7
    %v831 = vsub.s32 0, %v830
    %v832 = vrot.slane %v726, %v831
    %v833 = vlaneseq
    %v834 = vshrl.u32 %v833, 7
    %v835 = vsub.s32 0, %v834
    %v836 = vrot.slane %v727, %v835
    %v839 = vcombine.high %v814, %v814
    %v840 = vcombine.high %v815, %v815
    %v843 = vmul.f32 %v820, %v814
    %v844 = vmul.f32 %v824, %v839
    %v845 = vmul.f32 %v828, %v815
    %v846 = vmul.f32 %v832, %v840
    %v847 = vmul.f32 %v836, %v816
    %848 = vmatprep.subr.mxu0 %v735
    %849 = vmatpush1.msra.mxu0 %v734
    %850 = vmatprep.subr.mxu0 %v740
    %851 = vmatpush1.msra.mxu0 %v739
    %852 = vmatprep.subr.mxu0 %v745
    %853 = vmatpush1.msra.mxu0 %v744
    %854 = vmatprep.subr.mxu0 %v750
    %855 = vmatpush1.msra.mxu0 %v749
    %856 = vmatprep.subr.mxu0 %v755
    %857 = vmatpush1.msra.mxu0 %v754
    %858 = vmatprep.subr.mxu0 %v760
    %859 = vmatpush1.msra.mxu0 %v759
    %860 = vmatprep.subr.mxu0 %v765
    %861 = vmatpush1.msra.mxu0 %v764
    %862 = vmatprep.subr.mxu0 %v770
    %863 = vmatpush1.msra.mxu0 %v769
    %864 = vmatprep.subr.mxu0 %v775
    %865 = vmatpush1.msra.mxu0 %v774
    %866 = vmatprep.subr.mxu0 %v780
    %867 = vmatpush1.msra.mxu0 %v779
    %868 = vmatprep.subr.mxu0 %v785
    %869 = vmatpush1.msra.mxu0 %v784
    %870 = vmatprep.subr.mxu0 %v790
    %871 = vmatpush1.msra.mxu0 %v789
    %872 = vmatprep.subr.mxu0 %v795
    %873 = vmatpush1.msra.mxu0 %v794
    %874 = vmatprep.subr.mxu0 %v800
    %875 = vmatpush1.msra.mxu0 %v799
    %876 = vmatprep.subr.mxu0 %v805
    %877 = vmatpush1.msra.mxu0 %v804
    %878 = vmatprep.subr.mxu0 %v810
    %879 = vmatpush1.msra.mxu0 %v809
    %880 = vmatprep.subr.mxu0 0.0
    %881 = vmatpush1.msra.mxu0 0.0
    %882 = vmatprep.subr.mxu0 0.0
    %883 = vmatpush1.msra.mxu0 0.0
    %884 = vmatprep.subr.mxu0 0.0
    %885 = vmatpush1.msra.mxu0 0.0
    %886 = vmatprep.subr.mxu0 0.0
    %887 = vmatpush1.msra.mxu0 0.0
    %888 = vmatprep.subr.mxu0 0.0
    %889 = vmatpush1.msra.mxu0 0.0
    %890 = vmatprep.subr.mxu0 0.0
    %891 = vmatpush1.msra.mxu0 0.0
    %892 = vmatprep.subr.mxu0 0.0
    %893 = vmatpush1.msra.mxu0 0.0
    %894 = vmatprep.subr.mxu0 0.0
    %895 = vmatpush1.msra.mxu0 0.0
    %896 = vmatprep.subr.mxu0 0.0
    %897 = vmatpush1.msra.mxu0 0.0
    %898 = vmatprep.subr.mxu0 0.0
    %899 = vmatpush1.msra.mxu0 0.0
    %900 = vmatprep.subr.mxu0 0.0
    %901 = vmatpush1.msra.mxu0 0.0
    %902 = vmatprep.subr.mxu0 0.0
    %903 = vmatpush1.msra.mxu0 0.0
    %904 = vmatprep.subr.mxu0 0.0
    %905 = vmatpush1.msra.mxu0 0.0
    %906 = vmatprep.subr.mxu0 0.0
    %907 = vmatpush1.msra.mxu0 0.0
    %908 = vmatprep.subr.mxu0 0.0
    %909 = vmatpush1.msra.mxu0 0.0
    %910 = vmatprep.subr.mxu0 0.0
    %911 = vmatpush1.msra.mxu0 0.0
    %912 = vmatprep.mubr.f32.mxu0 0.0
    %913 = vmatmul.mubr.f32.gmra.mrb[0].mxu0 %v733
    %v914 = vpop.f32.mrb[0].mxu0
    %v915 = vadd.f32 %v843, %v914
    %v916 = vpop.f32.mrb[0].mxu0
    %v917 = vadd.f32 %v844, %v916
    %918 = vdwg.mxu0
    %919 = vmatprep.subr.mxu0 %v737
    %920 = vmatpush1.msra.mxu0 %v736
    %921 = vmatprep.subr.mxu0 %v742
    %922 = vmatpush1.msra.mxu0 %v741
    %923 = vmatprep.subr.mxu0 %v747
    %924 = vmatpush1.msra.mxu0 %v746
    %925 = vmatprep.subr.mxu0 %v752
    %926 = vmatpush1.msra.mxu0 %v751
    %927 = vmatprep.subr.mxu0 %v757
    %928 = vmatpush1.msra.mxu0 %v756
    %929 = vmatprep.subr.mxu0 %v762
    %930 = vmatpush1.msra.mxu0 %v761
    %931 = vmatprep.subr.mxu0 %v767
    %932 = vmatpush1.msra.mxu0 %v766
    %933 = vmatprep.subr.mxu0 %v772
    %934 = vmatpush1.msra.mxu0 %v771
    %935 = vmatprep.subr.mxu0 %v777
    %936 = vmatpush1.msra.mxu0 %v776
    %937 = vmatprep.subr.mxu0 %v782
    %938 = vmatpush1.msra.mxu0 %v781
    %939 = vmatprep.subr.mxu0 %v787
    %940 = vmatpush1.msra.mxu0 %v786
    %941 = vmatprep.subr.mxu0 %v792
    %942 = vmatpush1.msra.mxu0 %v791
    %943 = vmatprep.subr.mxu0 %v797
    %944 = vmatpush1.msra.mxu0 %v796
    %945 = vmatprep.subr.mxu0 %v802
    %946 = vmatpush1.msra.mxu0 %v801
    %947 = vmatprep.subr.mxu0 %v807
    %948 = vmatpush1.msra.mxu0 %v806
    %949 = vmatprep.subr.mxu0 %v812
    %950 = vmatpush1.msra.mxu0 %v811
    %951 = vmatprep.subr.mxu0 0.0
    %952 = vmatpush1.msra.mxu0 0.0
    %953 = vmatprep.subr.mxu0 0.0
    %954 = vmatpush1.msra.mxu0 0.0
    %955 = vmatprep.subr.mxu0 0.0
    %956 = vmatpush1.msra.mxu0 0.0
    %957 = vmatprep.subr.mxu0 0.0
    %958 = vmatpush1.msra.mxu0 0.0
    %959 = vmatprep.subr.mxu0 0.0
    %960 = vmatpush1.msra.mxu0 0.0
    %961 = vmatprep.subr.mxu0 0.0
    %962 = vmatpush1.msra.mxu0 0.0
    %963 = vmatprep.subr.mxu0 0.0
    %964 = vmatpush1.msra.mxu0 0.0
    %965 = vmatprep.subr.mxu0 0.0
    %966 = vmatpush1.msra.mxu0 0.0
    %967 = vmatprep.subr.mxu0 0.0
    %968 = vmatpush1.msra.mxu0 0.0
    %969 = vmatprep.subr.mxu0 0.0
    %970 = vmatpush1.msra.mxu0 0.0
    %971 = vmatprep.subr.mxu0 0.0
    %972 = vmatpush1.msra.mxu0 0.0
    %973 = vmatprep.subr.mxu0 0.0
    %974 = vmatpush1.msra.mxu0 0.0
    %975 = vmatprep.subr.mxu0 0.0
    %976 = vmatpush1.msra.mxu0 0.0
    %977 = vmatprep.subr.mxu0 0.0
    %978 = vmatpush1.msra.mxu0 0.0
    %979 = vmatprep.subr.mxu0 0.0
    %980 = vmatpush1.msra.mxu0 0.0
    %981 = vmatprep.subr.mxu0 0.0
    %982 = vmatpush1.msra.mxu0 0.0
    %983 = vmatprep.mubr.f32.mxu0 0.0
    %984 = vmatmul.mubr.f32.gmra.mrb[0].mxu0 %v733
    %v985 = vpop.f32.mrb[0].mxu0
    %v986 = vadd.f32 %v845, %v985
    %v987 = vpop.f32.mrb[0].mxu0
    %v988 = vadd.f32 %v846, %v987
    %989 = vdwg.mxu0
    %990 = vmatprep.subr.mxu0 0.0
    %991 = vmatpush1.msra.mxu0 %v738
    %992 = vmatprep.subr.mxu0 0.0
    %993 = vmatpush1.msra.mxu0 %v743
    %994 = vmatprep.subr.mxu0 0.0
    %995 = vmatpush1.msra.mxu0 %v748
    %996 = vmatprep.subr.mxu0 0.0
    %997 = vmatpush1.msra.mxu0 %v753
    %998 = vmatprep.subr.mxu0 0.0
    %999 = vmatpush1.msra.mxu0 %v758
    %1000 = vmatprep.subr.mxu0 0.0
    %1001 = vmatpush1.msra.mxu0 %v763
    %1002 = vmatprep.subr.mxu0 0.0
    %1003 = vmatpush1.msra.mxu0 %v768
    %1004 = vmatprep.subr.mxu0 0.0
    %1005 = vmatpush1.msra.mxu0 %v773
    %1006 = vmatprep.subr.mxu0 0.0
    %1007 = vmatpush1.msra.mxu0 %v778
    %1008 = vmatprep.subr.mxu0 0.0
    %1009 = vmatpush1.msra.mxu0 %v783
    %1010 = vmatprep.subr.mxu0 0.0
    %1011 = vmatpush1.msra.mxu0 %v788
    %1012 = vmatprep.subr.mxu0 0.0
    %1013 = vmatpush1.msra.mxu0 %v793
    %1014 = vmatprep.subr.mxu0 0.0
    %1015 = vmatpush1.msra.mxu0 %v798
    %1016 = vmatprep.subr.mxu0 0.0
    %1017 = vmatpush1.msra.mxu0 %v803
    %1018 = vmatprep.subr.mxu0 0.0
    %1019 = vmatpush1.msra.mxu0 %v808
    %1020 = vmatprep.subr.mxu0 0.0
    %1021 = vmatpush1.msra.mxu0 %v813
    %1022 = vmatprep.subr.mxu0 0.0
    %1023 = vmatpush1.msra.mxu0 0.0
    %1024 = vmatprep.subr.mxu0 0.0
    %1025 = vmatpush1.msra.mxu0 0.0
    %1026 = vmatprep.subr.mxu0 0.0
    %1027 = vmatpush1.msra.mxu0 0.0
    %1028 = vmatprep.subr.mxu0 0.0
    %1029 = vmatpush1.msra.mxu0 0.0
    %1030 = vmatprep.subr.mxu0 0.0
    %1031 = vmatpush1.msra.mxu0 0.0
    %1032 = vmatprep.subr.mxu0 0.0
    %1033 = vmatpush1.msra.mxu0 0.0
    %1034 = vmatprep.subr.mxu0 0.0
    %1035 = vmatpush1.msra.mxu0 0.0
    %1036 = vmatprep.subr.mxu0 0.0
    %1037 = vmatpush1.msra.mxu0 0.0
    %1038 = vmatprep.subr.mxu0 0.0
    %1039 = vmatpush1.msra.mxu0 0.0
    %1040 = vmatprep.subr.mxu0 0.0
    %1041 = vmatpush1.msra.mxu0 0.0
    %1042 = vmatprep.subr.mxu0 0.0
    %1043 = vmatpush1.msra.mxu0 0.0
    %1044 = vmatprep.subr.mxu0 0.0
    %1045 = vmatpush1.msra.mxu0 0.0
    %1046 = vmatprep.subr.mxu0 0.0
    %1047 = vmatpush1.msra.mxu0 0.0
    %1048 = vmatprep.subr.mxu0 0.0
    %1049 = vmatpush1.msra.mxu0 0.0
    %1050 = vmatprep.subr.mxu0 0.0
    %1051 = vmatpush1.msra.mxu0 0.0
    %1052 = vmatprep.subr.mxu0 0.0
    %1053 = vmatpush1.msra.mxu0 0.0
    %1054 = vmatprep.mubr.f32.mxu0 0.0
    %1055 = vmatmul.mubr.f32.gmra.mrb[0].mxu0 %v733
    %v1056 = vpop.f32.mrb[0].mxu0
    %v1057 = vadd.f32 %v847, %v1056
    %v1058 = vpop.f32.mrb[0].mxu0
    %1059 = vdwg.mxu0
    %v1064 = vcombine.low %v915, %v917
    %v1065 = vcombine.low %v986, %v988
    %1068 = vst [vmem:[%s4] sm:$0x77] %v1064
    %1069 = vst [vmem:[%s4 + $0x8] sm:$0x77] %v1065
    %1070 = vst [vmem:[%s4 + $0x10] sm:$0x7] %v1057
    // Predicated region
    $region26: #{asdf_autoencoder_forward.1} parent=1 // pred_check
      _
    $region27: #{asdf_autoencoder_forward.1} parent=1 // pred_check_branch
      %1072 = sbr.rel (0) target = $region29
    $region28: #{asdf_autoencoder_forward.1} parent=1 // pred_region
      _
    $region29: #{asdf_autoencoder_forward.1} parent=1 // pred_fallthru
      _
    // Predicated region
    $region30: #{asdf_autoencoder_forward.1} parent=1 // pred_check
      _
    $region31: #{asdf_autoencoder_forward.1} parent=1 // pred_check_branch
      %1074 = sbr.rel (0) target = $region33
    $region32: #{asdf_autoencoder_forward.1} parent=1 // pred_region
      _
    $region33: #{asdf_autoencoder_forward.1} parent=1 // pred_fallthru
      _
    %1075 = vsyncpa [#allocation3], 1
    %1076 = vsyncpa [#allocation5], 1

</llo_original>
